<compile_context>
chip_gen: v6e
topology: v6e:2x2x1
jax: 0.10.0
libtpu: 0.0.40
codegen_flags: <defaults>
</compile_context>

<pallas_src>
import jax
import jax.numpy as jnp
from jax import lax
from jax.experimental import pallas as pl
from jax.experimental.pallas import tpu as pltpu

BN_EPS = 1e-5


def _round_up(x, m):
    return (x + m - 1) // m * m


def base_linear_kernel(x_ref, w_ref, gamma_ref, beta_ref, o_ref, acc_ref):
    # Grid: (N tiles, K tiles); K (reduction) is the innermost axis.
    j = pl.program_id(0)
    k = pl.program_id(1)
    tk, tn = w_ref.shape  # W block is K-major (tk, tn)

    @pl.when(k == 0)
    def _():
        acc_ref[...] = jnp.zeros_like(acc_ref)

    # x is fully resident: slice the current 128-aligned K chunk out of it.
    x_k = x_ref[:, pl.ds(pl.multiple_of(k * tk, tk), tk)]          # (B, tk)
    # Canonical (B, tk) @ (tk, tn): no in-kernel transpose, f32 MXU accumulate.
    acc_ref[...] += jnp.dot(x_k, w_ref[...],
                            preferred_element_type=jnp.float32)

    @pl.when(k == pl.num_programs(1) - 1)
    def _():
        y = acc_ref[...]                                           # (B, tn) f32
        # Training-mode BatchNorm1d over the batch axis (biased variance).
        # (Linear bias omitted upstream: it cancels through the mean.)
        mean = jnp.mean(y, axis=0, keepdims=True)                  # (1, tn)
        d = y - mean
        var = jnp.mean(d * d, axis=0, keepdims=True)               # (1, tn)
        # gamma/beta are resident (1, out_pad); grab this tile's slice.
        g = gamma_ref[:, pl.ds(pl.multiple_of(j * tn, tn), tn)]
        b = beta_ref[:, pl.ds(pl.multiple_of(j * tn, tn), tn)]
        # Fold normalize + affine into one FMA; rsqrt goes to the EUP.
        s = g * lax.rsqrt(var + BN_EPS)                            # (1, tn)
        t = b - mean * s                                           # (1, tn)
        o_ref[...] = jnp.maximum(y * s + t, 0.0).astype(o_ref.dtype)


def base_linear(x, weight, bias, gamma, beta, *, tn=512, tk=512,
                compute_dtype=None):
    """x: (B, in_f), weight: (out_f, in_f) [PyTorch layout], gamma/beta: (out_f,)."""
    B, in_f = x.shape
    out_f, _ = weight.shape
    # The Linear bias cancels exactly through training-mode BatchNorm (the
    # per-column mean is subtracted right after), so it is not fed in.
    del bias

    # --- tile sizing (128-aligned; capped to the padded problem) -----------
    in_pad0 = _round_up(in_f, 128)
    out_pad0 = _round_up(out_f, 128)
    tk = max(128, (tk // 128) * 128)
    tn = max(128, (tn // 128) * 128)
    tk = min(tk, in_pad0)
    tn = min(tn, out_pad0)
    # Keep the parallel N axis >= 2 tiles when possible (megacore on v7x).
    while tn > 128 and _round_up(out_f, tn) // tn < 2:
        tn = max(128, ((tn // 2) // 128) * 128)
    in_pad = _round_up(in_f, tk)
    out_pad = _round_up(out_f, tn)

    # --- padding only when actually ragged ---------------------------------
    x_p = x if in_pad == in_f else jnp.pad(x, ((0, 0), (0, in_pad - in_f)))
    # Feed W K-major (in_pad, out_pad).  In a real model the parameter would
    # be stored K-major (and pre-padded) once at init; this one-time wrapper
    # transform stands in for that.
    w_km = weight.T
    if in_pad != in_f or out_pad != out_f:
        w_km = jnp.pad(w_km, ((0, in_pad - in_f), (0, out_pad - out_f)))
    gamma_p = gamma.reshape(1, out_f)
    beta_p = beta.reshape(1, out_f)
    if out_pad != out_f:
        gamma_p = jnp.pad(gamma_p, ((0, 0), (0, out_pad - out_f)))
        beta_p = jnp.pad(beta_p, ((0, 0), (0, out_pad - out_f)))

    # Optional reduced-precision MXU operands (f32 accumulation preserved).
    if compute_dtype is not None and compute_dtype != x_p.dtype:
        x_p = x_p.astype(compute_dtype)
        w_km = w_km.astype(compute_dtype)

    grid = (out_pad // tn, in_pad // tk)

    itemsize = jnp.dtype(x_p.dtype).itemsize
    # VMEM footprint (double-buffered inputs/outputs + f32 accumulator).
    vmem_need = (2 * B * in_pad * itemsize          # resident x
                 + 2 * tk * tn * itemsize           # W tiles
                 + 2 * 2 * out_pad * 4              # gamma, beta
                 + 2 * B * tn * 4                   # output tiles
                 + B * tn * 4)                      # accumulator scratch
    vmem_limit = int(min(max(2 * vmem_need, 32 * 1024 * 1024),
                         64 * 1024 * 1024))

    cost = pl.CostEstimate(
        flops=2 * B * in_pad * out_pad,
        transcendentals=out_pad,
        bytes_accessed=(B * in_pad * itemsize            # x read once (resident)
                        + in_pad * out_pad * itemsize    # W read once
                        + 2 * out_pad * 4                # gamma, beta
                        + B * out_pad * 4))              # output write

    out_arr = pl.pallas_call(
        base_linear_kernel,
        out_shape=jax.ShapeDtypeStruct((B, out_pad), jnp.float32),
        grid_spec=pltpu.PrefetchScalarGridSpec(
            num_scalar_prefetch=0,
            grid=grid,
            in_specs=[
                # x: fully resident, fetched once for the whole grid.
                pl.BlockSpec((B, in_pad), lambda j, k: (0, 0)),
                # W: K-major (tk, tn) tile, streamed along the K reduction.
                pl.BlockSpec((tk, tn), lambda j, k: (k, j)),
                # gamma/beta: fully resident (tiny).
                pl.BlockSpec((1, out_pad), lambda j, k: (0, 0)),
                pl.BlockSpec((1, out_pad), lambda j, k: (0, 0)),
            ],
            out_specs=pl.BlockSpec((B, tn), lambda j, k: (0, j)),
            scratch_shapes=[pltpu.VMEM((B, tn), jnp.float32)],
        ),
        compiler_params=pltpu.CompilerParams(
            dimension_semantics=("parallel", "arbitrary"),
            vmem_limit_bytes=vmem_limit),
        cost_estimate=cost,
    )(x_p, w_km, gamma_p, beta_p)

    return out_arr if out_pad == out_f else out_arr[:, :out_f]


def reference(x, weight, bias, gamma, beta):
    y = x @ weight.T + bias
    mean = jnp.mean(y, axis=0, keepdims=True)
    var = jnp.mean((y - mean) ** 2, axis=0, keepdims=True)
    z = (y - mean) / jnp.sqrt(var + BN_EPS) * gamma + beta
    return jnp.maximum(z, 0.0)


if __name__ == "__main__":
    key = jax.random.PRNGKey(0)
    B, in_features, out_features = 8, 32, 64

    k_x, k_w, k_b, k_g, k_bt = jax.random.split(key, 5)
    x = jax.random.normal(k_x, (B, in_features), dtype=jnp.float32)
    bound = 1.0 / jnp.sqrt(in_features)
    weight = jax.random.uniform(k_w, (out_features, in_features),
                                minval=-bound, maxval=bound, dtype=jnp.float32)
    bias = jax.random.uniform(k_b, (out_features,),
                              minval=-bound, maxval=bound, dtype=jnp.float32)
    gamma = 1.0 + 0.1 * jax.random.normal(k_g, (out_features,), dtype=jnp.float32)
    beta = 0.1 * jax.random.normal(k_bt, (out_features,), dtype=jnp.float32)

    # TODO(synk): BatchNorm1d running_mean/running_var updates are not emitted
    # (only the forward activation is produced); if they are added later, the
    # Linear bias must be re-included since it does NOT cancel in running_mean.
    out = jax.block_until_ready(base_linear(x, weight, bias, gamma, beta))

    ref = reference(x, weight, bias, gamma, beta)
    assert out.shape == (B, out_features)
    assert jnp.allclose(out, ref, atol=1e-4, rtol=1e-4), "mismatch vs reference"

    print("KERNEL_OK")
</pallas_src>

<mosaic_0001>
module attributes {stable_mosaic.version = 11 : i64} {
  func.func @base_linear_kernel(%arg0: i32, %arg1: i32, %arg2: memref<8x128xf32, #tpu.memory_space<vmem>>, %arg3: memref<128x128xf32, #tpu.memory_space<vmem>>, %arg4: memref<1x128xf32, #tpu.memory_space<vmem>>, %arg5: memref<1x128xf32, #tpu.memory_space<vmem>>, %arg6: memref<8x128xf32, #tpu.memory_space<vmem>>, %arg7: memref<8x128xf32, #tpu.memory_space<vmem>>) attributes {dimension_semantics = [#tpu.dimension_semantics<parallel>, #tpu.dimension_semantics<arbitrary>], iteration_bounds = array<i64: 1, 1>, scalar_prefetch = 0 : i64, scratch_operands = 1 : i64, tpu.core_type = #tpu.core_type<tc>, window_params = [{pipeline_mode = #tpu.pipeline_mode<synchronous>, transform_indices = @transform_0, window_bounds = array<i64: 8, 128>}, {transform_indices = @transform_1, window_bounds = array<i64: 128, 128>}, {pipeline_mode = #tpu.pipeline_mode<synchronous>, transform_indices = @transform_2, window_bounds = array<i64: 1, 128>}, {pipeline_mode = #tpu.pipeline_mode<synchronous>, transform_indices = @transform_3, window_bounds = array<i64: 1, 128>}, {transform_indices = @transform_4, window_bounds = array<i64: 8, 128>}]} {
    %c0_i32 = arith.constant 0 : i32
    %0 = arith.cmpi eq, %arg1, %c0_i32 : i32
    %1 = arith.extui %0 : i1 to i32
    %c0_i32_0 = arith.constant 0 : i32
    %2 = arith.cmpi ne, %1, %c0_i32_0 : i32
    scf.if %2 {
      %cst_9 = arith.constant 0.000000e+00 : f32
      %15 = vector.broadcast %cst_9 : f32 to vector<8x128xf32>
      %c0_10 = arith.constant 0 : index
      %c0_11 = arith.constant 0 : index
      %16 = vector.load %arg7[%c0_10, %c0_11] : memref<8x128xf32, #tpu.memory_space<vmem>>, vector<8x128xf32>
      tpu.vector_store %arg7[%c0_10, %c0_11], %15 {strides = array<i32>} : memref<8x128xf32, #tpu.memory_space<vmem>>, vector<8x128xf32>,
    } else {
    }
    %c128_i32 = arith.constant 128 : i32
    %3 = arith.muli %arg1, %c128_i32 : i32
    %4 = tpu.assume_multiple %3, 128 : i32
    %c0 = arith.constant 0 : index
    %5 = arith.index_cast %4 : i32 to index
    %6 = vector.load %arg2[%c0, %5] : memref<8x128xf32, #tpu.memory_space<vmem>>, vector<8x128xf32>
    %c0_1 = arith.constant 0 : index
    %c0_2 = arith.constant 0 : index
    %7 = vector.load %arg7[%c0_1, %c0_2] : memref<8x128xf32, #tpu.memory_space<vmem>>, vector<8x128xf32>
    %c0_3 = arith.constant 0 : index
    %c0_4 = arith.constant 0 : index
    %8 = vector.load %arg3[%c0_3, %c0_4] : memref<128x128xf32, #tpu.memory_space<vmem>>, vector<128x128xf32>
    %cst = arith.constant dense<0.000000e+00> : vector<8x128xf32>
    %9 = tpu.matmul %6, %8, %cst {dimension_numbers = #tpu.dot_dimension_numbers<[1], [0], [0], [1], [0, 0, 1, 1], [], []>} : vector<8x128xf32>, vector<128x128xf32>, vector<8x128xf32> -> vector<8x128xf32>
    %10 = arith.addf %7, %9 : vector<8x128xf32>
    %c0_5 = arith.constant 0 : index
    %c0_6 = arith.constant 0 : index
    %11 = vector.load %arg7[%c0_5, %c0_6] : memref<8x128xf32, #tpu.memory_space<vmem>>, vector<8x128xf32>
    tpu.vector_store %arg7[%c0_5, %c0_6], %10 {strides = array<i32>} : memref<8x128xf32, #tpu.memory_space<vmem>>, vector<8x128xf32>,
    %c0_i32_7 = arith.constant 0 : i32
    %12 = arith.cmpi eq, %arg1, %c0_i32_7 : i32
    %13 = arith.extui %12 : i1 to i32
    %c0_i32_8 = arith.constant 0 : i32
    %14 = arith.cmpi ne, %13, %c0_i32_8 : i32
    scf.if %14 {
      %c0_9 = arith.constant 0 : index
      %c0_10 = arith.constant 0 : index
      %15 = vector.load %arg7[%c0_9, %c0_10] : memref<8x128xf32, #tpu.memory_space<vmem>>, vector<8x128xf32>
      %cst_11 = arith.constant dense<0.000000e+00> : vector<128xf32>
      %16 = vector.multi_reduction <add>, %15, %cst_11 [0] : vector<8x128xf32> to vector<128xf32>
      %17 = vector.shape_cast %16 : vector<128xf32> to vector<1x128xf32>
      %cst_12 = arith.constant 8.000000e+00 : f32
      %18 = vector.broadcast %cst_12 : f32 to vector<1x128xf32>
      %19 = arith.divf %17, %18 : vector<1x128xf32>
      %20 = vector.broadcast %19 : vector<1x128xf32> to vector<8x128xf32>
      %21 = arith.subf %15, %20 : vector<8x128xf32>
      %22 = arith.mulf %21, %21 : vector<8x128xf32>
      %cst_13 = arith.constant dense<0.000000e+00> : vector<128xf32>
      %23 = vector.multi_reduction <add>, %22, %cst_13 [0] : vector<8x128xf32> to vector<128xf32>
      %24 = vector.shape_cast %23 : vector<128xf32> to vector<1x128xf32>
      %cst_14 = arith.constant 8.000000e+00 : f32
      %25 = vector.broadcast %cst_14 : f32 to vector<1x128xf32>
      %26 = arith.divf %24, %25 : vector<1x128xf32>
      %c128_i32_15 = arith.constant 128 : i32
      %27 = arith.muli %arg0, %c128_i32_15 : i32
      %28 = tpu.assume_multiple %27, 128 : i32
      %c0_16 = arith.constant 0 : index
      %29 = arith.index_cast %28 : i32 to index
      %30 = vector.load %arg4[%c0_16, %29] : memref<1x128xf32, #tpu.memory_space<vmem>>, vector<1x128xf32>
      %c128_i32_17 = arith.constant 128 : i32
      %31 = arith.muli %arg0, %c128_i32_17 : i32
      %32 = tpu.assume_multiple %31, 128 : i32
      %c0_18 = arith.constant 0 : index
      %33 = arith.index_cast %32 : i32 to index
      %34 = vector.load %arg5[%c0_18, %33] : memref<1x128xf32, #tpu.memory_space<vmem>>, vector<1x128xf32>
      %cst_19 = arith.constant 9.99999974E-6 : f32
      %35 = vector.broadcast %cst_19 : f32 to vector<1x128xf32>
      %36 = arith.addf %26, %35 : vector<1x128xf32>
      %37 = math.rsqrt %36 : vector<1x128xf32>
      %38 = arith.mulf %30, %37 : vector<1x128xf32>
      %39 = arith.mulf %19, %38 : vector<1x128xf32>
      %40 = arith.subf %34, %39 : vector<1x128xf32>
      %41 = vector.broadcast %38 : vector<1x128xf32> to vector<8x128xf32>
      %42 = arith.mulf %15, %41 : vector<8x128xf32>
      %43 = vector.broadcast %40 : vector<1x128xf32> to vector<8x128xf32>
      %44 = arith.addf %42, %43 : vector<8x128xf32>
      %cst_20 = arith.constant 0.000000e+00 : f32
      %45 = vector.broadcast %cst_20 : f32 to vector<8x128xf32>
      %46 = arith.maximumf %44, %45 : vector<8x128xf32>
      %c0_21 = arith.constant 0 : index
      %c0_22 = arith.constant 0 : index
      %47 = vector.load %arg6[%c0_21, %c0_22] : memref<8x128xf32, #tpu.memory_space<vmem>>, vector<8x128xf32>
      tpu.vector_store %arg6[%c0_21, %c0_22], %46 {strides = array<i32>} : memref<8x128xf32, #tpu.memory_space<vmem>>, vector<8x128xf32>,
    } else {
    }
    return
  }
  func.func @transform_0(%arg0: i32, %arg1: i32) -> (i32, i32) {
    %c0_i32 = arith.constant 0 : i32
    %c0_i32_0 = arith.constant 0 : i32
    %c0_i32_1 = arith.constant 0 : i32
    return %c0_i32, %c0_i32_0 : i32, i32
  }
  func.func @transform_1(%arg0: i32, %arg1: i32) -> (i32, i32) {
    %c0_i32 = arith.constant 0 : i32
    return %arg1, %arg0 : i32, i32
  }
  func.func @transform_2(%arg0: i32, %arg1: i32) -> (i32, i32) {
    %c0_i32 = arith.constant 0 : i32
    %c0_i32_0 = arith.constant 0 : i32
    %c0_i32_1 = arith.constant 0 : i32
    return %c0_i32, %c0_i32_0 : i32, i32
  }
  func.func @transform_3(%arg0: i32, %arg1: i32) -> (i32, i32) {
    %c0_i32 = arith.constant 0 : i32
    %c0_i32_0 = arith.constant 0 : i32
    %c0_i32_1 = arith.constant 0 : i32
    return %c0_i32, %c0_i32_0 : i32, i32
  }
  func.func @transform_4(%arg0: i32, %arg1: i32) -> (i32, i32) {
    %c0_i32 = arith.constant 0 : i32
    %c0_i32_0 = arith.constant 0 : i32
    return %c0_i32, %arg0 : i32, i32
  }
}

</mosaic_0001>

<llo_original>
// kernel: tpu_custom_call.1
$region0: #{tpu_custom_call.1}
  #allocation0 [shape = 'u32[]', space=smem, size = 0x4, offset = 0x4, fixed_abs, tag = 'smem constant byte address 0x4 - core index']
  #allocation1 [shape = 'u32[144,128]{1,0:T(1,128)}', space=vmem, size = 0x12000, scoped, tag = 'internal scratch']
  #allocation2 [shape = 'f32[8,128]{1,0:T(8,128)}', space=vmem, size = 0x1000, scoped, tag = 'scratch operand']
  %s0 = inlined_call_operand.hbm [shape: f32[8,128], index: 0, kind: input, shape index: {}]
  %s1 = inlined_call_operand.hbm [shape: f32[128,128], index: 1, kind: input, shape index: {}]
  %s2 = inlined_call_operand.vmem [shape: f32[1,128], index: 2, kind: input, shape index: {}]
  %s3 = inlined_call_operand.vmem [shape: f32[1,128], index: 3, kind: input, shape index: {}]
  %s4 = inlined_call_operand.hbm [shape: f32[8,128], index: 4, kind: output, shape index: {}]
  %s5 = sld [smem:[#allocation0]]
  $region42: #{tpu_custom_call.1} parent=0
    _
  %s7 = ssub.s32 1, %s5
  %s8 = scalar_select 0, %s7, %s5
  $region1: #{tpu_custom_call.1} parent=0
    #allocation3 [shape = 'u8[4096]{0}', space=vmem, size = 0x1000, scoped, tag = 'input window, operand 0, single buffered']
    #allocation4 [shape = 's32[1]{0}', space=sflag, size = 0x4, scoped, tag = 'scoped memory for tpu_custom_call.1']
    #allocation5 [shape = 's32[1]{0}', space=sflag, size = 0x4, scoped, tag = 'scoped memory for tpu_custom_call.1']
    #allocation6 [shape = 'u8[65536]{0}', space=vmem, size = 0x10000, scoped, tag = 'input window, operand 1, single buffered']
    #allocation7 [shape = 's32[1]{0}', space=sflag, size = 0x4, scoped, tag = 'scoped memory for tpu_custom_call.1']
    #allocation8 [shape = 'u8[4096]{0}', space=vmem, size = 0x1000, scoped, tag = 'output window, operand 0, single buffered']
    %9 = vsyncpa [#allocation4], 0
    %10 = vsyncpa [#allocation7], 0
    %11 = vsyncpa [#allocation5], 0
    // Predicated region
    $region2: #{tpu_custom_call.1} parent=1 // pred_check
      _
    $region3: #{tpu_custom_call.1} parent=1 // pred_check_branch
      %13 = sbr.rel (0) target = $region5
    $region4: #{tpu_custom_call.1} parent=1 // pred_region
      %s15 = ssub.s32 128, 128
      %16 = vsyncadd [#allocation4], %s15
      %s18 = sshll.u32 [#allocation3], 4
      %s19 = int_to_ptr.vmem [resolvable:$true] %s18
      %21 = dma.hbm_to_vmem [thread:$0]  %s0, 128, %s19, [#allocation4]
    $region5: #{tpu_custom_call.1} parent=1 // pred_fallthru
      _
    // Predicated region
    $region6: #{tpu_custom_call.1} parent=1 // pred_check
      _
    $region7: #{tpu_custom_call.1} parent=1 // pred_check_branch
      %23 = sbr.rel (0) target = $region9
    $region8: #{tpu_custom_call.1} parent=1 // pred_region
      %s25 = ssub.s32 2048, 2048
      %26 = vsyncadd [#allocation7], %s25
      %s27 = sshll.u32 [#allocation6], 4
      %s28 = int_to_ptr.vmem [resolvable:$true] %s27
      %33 = dma.hbm_to_vmem [thread:$0]  %s1, 2048, %s28, [#allocation7], 128, 128, 8
    $region9: #{tpu_custom_call.1} parent=1 // pred_fallthru
      _
    // Predicated region
    $region10: #{tpu_custom_call.1} parent=1 // pred_check
      _
    $region11: #{tpu_custom_call.1} parent=1 // pred_check_branch
      %35 = sbr.rel (0) target = $region13
    $region12: #{tpu_custom_call.1} parent=1 // pred_region
      _
    $region13: #{tpu_custom_call.1} parent=1 // pred_fallthru
      _
    // Predicated region
    $region14: #{tpu_custom_call.1} parent=1 // pred_check
      _
    $region15: #{tpu_custom_call.1} parent=1 // pred_check_branch
      %37 = sbr.rel (0) target = $region17
    $region16: #{tpu_custom_call.1} parent=1 // pred_region
      _
    $region17: #{tpu_custom_call.1} parent=1 // pred_fallthru
      _
    // Predicated region
    $region18: #{tpu_custom_call.1} parent=1 // pred_check
      _
    $region19: #{tpu_custom_call.1} parent=1 // pred_check_branch
      %39 = sbr.rel (0) target = $region21
    $region20: #{tpu_custom_call.1} parent=1 // pred_region
      %40 = dma.done [#allocation4], 128
    $region21: #{tpu_custom_call.1} parent=1 // pred_fallthru
      _
    // Predicated region
    $region22: #{tpu_custom_call.1} parent=1 // pred_check
      _
    $region23: #{tpu_custom_call.1} parent=1 // pred_check_branch
      %42 = sbr.rel (0) target = $region25
    $region24: #{tpu_custom_call.1} parent=1 // pred_region
      %43 = dma.done [#allocation7], 2048
    $region25: #{tpu_custom_call.1} parent=1 // pred_fallthru
      _
    %p44 = scmp.eq.s32.totalorder 0, 0
    // Predicated region
    $region26: #{tpu_custom_call.1} parent=1 // pred_check
      %p45 = pneg %p44
    $region27: #{tpu_custom_call.1} parent=1 // pred_check_branch
      %47 = sbr.rel (%p45) target = $region29
    $region28: #{tpu_custom_call.1} parent=1 // pred_region
      %48 = vst [vmem:[#allocation2] sm:$0xff] 0.0
    $region29: #{tpu_custom_call.1} parent=1 // pred_fallthru
      _
    %s49 = smul.u32 0, 128
    %s50 = sshra.s32 %s49, 7
    %s51 = sand.u32 %s49, 127
    %s52 = scalar_lea.vmem [#allocation3], %s50
    %v53 = vld [vmem:[%s52] sm:$0xff]
    %v54 = vld [vmem:[#allocation2] sm:$0xff]
    %v55 = vld [vmem:[#allocation6] sm:$0xff]
    %v56 = vld [vmem:[#allocation6 + $0x8] sm:$0xff]
    %v57 = vld [vmem:[#allocation6 + $0x10] sm:$0xff]
    %v58 = vld [vmem:[#allocation6 + $0x18] sm:$0xff]
    %v59 = vld [vmem:[#allocation6 + $0x20] sm:$0xff]
    %v60 = vld [vmem:[#allocation6 + $0x28] sm:$0xff]
    %v61 = vld [vmem:[#allocation6 + $0x30] sm:$0xff]
    %v62 = vld [vmem:[#allocation6 + $0x38] sm:$0xff]
    %v63 = vld [vmem:[#allocation6 + $0x40] sm:$0xff]
    %v64 = vld [vmem:[#allocation6 + $0x48] sm:$0xff]
    %v65 = vld [vmem:[#allocation6 + $0x50] sm:$0xff]
    %v66 = vld [vmem:[#allocation6 + $0x58] sm:$0xff]
    %v67 = vld [vmem:[#allocation6 + $0x60] sm:$0xff]
    %v68 = vld [vmem:[#allocation6 + $0x68] sm:$0xff]
    %v69 = vld [vmem:[#allocation6 + $0x70] sm:$0xff]
    %v70 = vld [vmem:[#allocation6 + $0x78] sm:$0xff]
    %71 = vmatprep.subr.mxu0 0.0
    %72 = vmatpush1.msra.mxu0 %v70
    %73 = vmatprep.subr.mxu0 0.0
    %74 = vmatpush1.msra.mxu0 %v69
    %75 = vmatprep.subr.mxu0 0.0
    %76 = vmatpush1.msra.mxu0 %v68
    %77 = vmatprep.subr.mxu0 0.0
    %78 = vmatpush1.msra.mxu0 %v67
    %79 = vmatprep.subr.mxu0 0.0
    %80 = vmatpush1.msra.mxu0 %v66
    %81 = vmatprep.subr.mxu0 0.0
    %82 = vmatpush1.msra.mxu0 %v65
    %83 = vmatprep.subr.mxu0 0.0
    %84 = vmatpush1.msra.mxu0 %v64
    %85 = vmatprep.subr.mxu0 0.0
    %86 = vmatpush1.msra.mxu0 %v63
    %87 = vmatprep.subr.mxu0 0.0
    %88 = vmatpush1.msra.mxu0 %v62
    %89 = vmatprep.subr.mxu0 0.0
    %90 = vmatpush1.msra.mxu0 %v61
    %91 = vmatprep.subr.mxu0 0.0
    %92 = vmatpush1.msra.mxu0 %v60
    %93 = vmatprep.subr.mxu0 0.0
    %94 = vmatpush1.msra.mxu0 %v59
    %95 = vmatprep.subr.mxu0 0.0
    %96 = vmatpush1.msra.mxu0 %v58
    %97 = vmatprep.subr.mxu0 0.0
    %98 = vmatpush1.msra.mxu0 %v57
    %99 = vmatprep.subr.mxu0 0.0
    %100 = vmatpush1.msra.mxu0 %v56
    %101 = vmatprep.subr.mxu0 0.0
    %102 = vmatpush1.msra.mxu0 %v55
    %103 = vmatprep.subr.mxu0 0.0
    %104 = vmatpush2.msra.mxu0 0.0
    %105 = vmatprep.subr.mxu0 0.0
    %106 = vmatpush2.msra.mxu0 0.0
    %107 = vmatprep.subr.mxu0 0.0
    %108 = vmatpush2.msra.mxu0 0.0
    %109 = vmatprep.subr.mxu0 0.0
    %110 = vmatpush2.msra.mxu0 0.0
    %111 = vmatprep.subr.mxu0 0.0
    %112 = vmatpush2.msra.mxu0 0.0
    %113 = vmatprep.subr.mxu0 0.0
    %114 = vmatpush2.msra.mxu0 0.0
    %115 = vmatprep.subr.mxu0 0.0
    %116 = vmatpush2.msra.mxu0 0.0
    %117 = vmatprep.subr.mxu0 0.0
    %118 = vmatpush2.msra.mxu0 0.0
    %119 = vmatprep.subr.mxu0 0.0
    %120 = vmatpush2.msra.mxu0 0.0
    %121 = vmatprep.subr.mxu0 0.0
    %122 = vmatpush2.msra.mxu0 0.0
    %123 = vmatprep.subr.mxu0 0.0
    %124 = vmatpush2.msra.mxu0 0.0
    %125 = vmatprep.subr.mxu0 0.0
    %126 = vmatpush2.msra.mxu0 0.0
    %127 = vmatprep.subr.mxu0 0.0
    %128 = vmatpush2.msra.mxu0 0.0
    %129 = vmatprep.subr.mxu0 0.0
    %130 = vmatpush2.msra.mxu0 0.0
    %131 = vmatprep.subr.mxu0 0.0
    %132 = vmatpush2.msra.mxu0 0.0
    %133 = vmatprep.subr.mxu0 0.0
    %134 = vmatpush2.msra.mxu0 0.0
    %135 = vmatprep.mubr.f32.mxu0 0.0
    %136 = vmatmul.mubr.f32.gmra.mxu0 %v53
    %v137 = vpop.f32.mrf.mxu0
    %v138 = vadd.f32 0.0, %v137
    %v139 = vpop.f32.mrf.mxu0
    %140 = vdwg.mxu0
    %v141 = vadd.f32 %v54, %v138
    %142 = vst [vmem:[#allocation2] sm:$0xff] %v141
    // Predicated region
    $region30: #{tpu_custom_call.1} parent=1 // pred_check
      %p143 = pneg %p44
    $region31: #{tpu_custom_call.1} parent=1 // pred_check_branch
      %145 = sbr.rel (%p143) target = $region33
    $region32: #{tpu_custom_call.1} parent=1 // pred_region
      %v146 = vld [vmem:[#allocation2] sm:$0xff]
      %v147 = vrot.slane %v146, 4
      %v148 = vadd.f32 %v146, %v147
      %v149 = vrot.slane %v148, 2
      %v150 = vadd.f32 %v148, %v149
      %v151 = vrot.slane %v150, 1
      %v152 = vadd.f32 %v150, %v151
      %v153 = vrcp.pop 8.0
      %v154 = vmul.f32 %v152, %v153
      %v155 = vsub.f32 %v146, %v154
      %v156 = vmul.f32 %v155, %v155
      %v157 = vrot.slane %v156, 4
      %v158 = vadd.f32 %v156, %v157
      %v159 = vrot.slane %v158, 2
      %v160 = vadd.f32 %v158, %v159
      %v161 = vrot.slane %v160, 1
      %v162 = vadd.f32 %v160, %v161
      %v163 = vmul.f32 %v162, %v153
      %s164 = smul.u32 0, 128
      %s165 = sshra.s32 %s164, 7
      %s166 = sand.u32 %s164, 127
      %s167 = scalar_lea.vmem %s2, %s165
      %v168 = vld [vmem:[%s167] sm:$0x1]
      %s169 = scalar_lea.vmem %s3, %s165
      %v170 = vld [vmem:[%s169] sm:$0x1]
      %v171 = vadd.f32 %v163, 1e-05
      %v172 = vrsqrt.pop %v171
      %v173 = vmul.f32 %v168, %v172
      %v174 = vmul.f32 %v154, %v173
      %v175 = vsub.f32 %v170, %v174
      %v177 = vlaneseq
      %v178 = vshrl.u32 %v177, 7
      %v179 = vsub.s32 0, %v178
      %v180 = vrot.slane %v173, %v179
      %v182 = vmul.f32 %v146, %v180
      %v184 = vlaneseq
      %v185 = vshrl.u32 %v184, 7
      %v186 = vsub.s32 0, %v185
      %v187 = vrot.slane %v175, %v186
      %v189 = vadd.f32 %v182, %v187
      %v190 = vmax.f32 %v189, 0.0
      %191 = vst [vmem:[#allocation8] sm:$0xff] %v190
    $region33: #{tpu_custom_call.1} parent=1 // pred_fallthru
      _
    // Predicated region
    $region34: #{tpu_custom_call.1} parent=1 // pred_check
      _
    $region35: #{tpu_custom_call.1} parent=1 // pred_check_branch
      %193 = sbr.rel (0) target = $region37
    $region36: #{tpu_custom_call.1} parent=1 // pred_region
      %s195 = ssub.s32 128, 128
      %196 = vsyncadd [#allocation5], %s195
      %s198 = sshll.u32 [#allocation8], 4
      %s199 = int_to_ptr.vmem [resolvable:$true] %s198
      %201 = dma.vmem_to_hbm [thread:$0]  %s199, 128, %s4, [#allocation5]
    $region37: #{tpu_custom_call.1} parent=1 // pred_fallthru
      _
    // Predicated region
    $region38: #{tpu_custom_call.1} parent=1 // pred_check
      _
    $region39: #{tpu_custom_call.1} parent=1 // pred_check_branch
      %203 = sbr.rel (0) target = $region41
    $region40: #{tpu_custom_call.1} parent=1 // pred_region
      %204 = dma.done [#allocation5], 128
    $region41: #{tpu_custom_call.1} parent=1 // pred_fallthru
      _
    %205 = vsyncpa [#allocation4], 1
    %206 = vsyncpa [#allocation7], 1
    %207 = vsyncpa [#allocation5], 1

</llo_original>
